<compile_context>
chip_gen: v7x
topology: tpu7x:2x2x1
jax: 0.10.0
libtpu: 0.0.40
codegen_flags: <defaults>
</compile_context>

<pallas_src>
import jax
import jax.numpy as jnp
from jax.experimental import pallas as pl
from jax.experimental.pallas import tpu as pltpu


def mlp_kernel(x_t_ref, w1_ref, b1_ref, w2_ref, b2_ref, out_ref):
    # fc1 (transposed layout): [H, D_in] @ [D_in, TB] -> [H, TB]   (MXU)
    h = jnp.dot(w1_ref[...], x_t_ref[...], preferred_element_type=jnp.float32)
    h = jnp.maximum(h + b1_ref[...], 0.0)                     # bias + ReLU (VPU)

    d_out = w2_ref.shape[1]
    if d_out == 1:
        # fc2 as multiply + sublane reduce: ([H, TB] * [H, 1]) summed over H.
        o = jnp.sum(h * w2_ref[...], axis=0, keepdims=True)   # [1, TB]
    else:
        # General D_out: contract over H -> [D_out, TB] (still lane-dense).
        o = jax.lax.dot_general(
            w2_ref[...], h, (((0,), (0,)), ((), ())),
            preferred_element_type=jnp.float32)
    o = o + b2_ref[...]

    # sigmoid via tanh on the EUP slot (no VALU divide).
    out_ref[...] = (0.5 * (jnp.tanh(0.5 * o) + 1.0)).astype(out_ref.dtype)


def mlp_classifier_forward(x, x_agents, w1, b1, w2, b2, *, max_batch_tile=512):
    """Fused MLP_Classifier forward.

    x       : [B, D_in]
    x_agents: unused by the module's forward (accepted for signature parity)
    w1      : [H, D_in]   b1: [H]       (PyTorch nn.Linear layout: [out, in])
    w2      : [D_out, H]  b2: [D_out]
    returns : [B, D_out] = sigmoid(relu(x @ w1.T + b1) @ w2.T + b2)
    """
    del x_agents  # unused by MLP_Classifier.forward
    B, D_in = x.shape
    H = w1.shape[0]
    D_out = w2.shape[0]

    # Batch tile: multiple of 128 (lane-dense), capped so tiles double-buffer
    # comfortably in VMEM even on v7x (64 MiB).
    TB = min(max_batch_tile, max(128, ((B + 127) // 128) * 128))
    B_pad = ((B + TB - 1) // TB) * TB
    n_tiles = B_pad // TB

    # Transposed activations (batch on lanes), zero-pad the batch.
    x_t = x.T                                                  # [D_in, B]
    if B_pad != B:
        x_t = jnp.pad(x_t, ((0, 0), (0, B_pad - B)))

    b1_col = b1.reshape(H, 1)
    w2_t = w2.T                                                # [H, D_out]
    b2_col = b2.reshape(D_out, 1)

    flops = 2 * B_pad * H * (D_in + D_out)
    bytes_accessed = 4 * (D_in * B_pad + H * D_in + H + H * D_out + D_out
                          + D_out * B_pad)

    out_t = pl.pallas_call(
        mlp_kernel,
        out_shape=jax.ShapeDtypeStruct((D_out, B_pad), x.dtype),
        grid=(n_tiles,),
        in_specs=[
            pl.BlockSpec((D_in, TB), lambda i: (0, i)),   # activations: batch-tiled
            pl.BlockSpec((H, D_in), lambda i: (0, 0)),    # w1: resident in VMEM
            pl.BlockSpec((H, 1), lambda i: (0, 0)),       # b1: resident
            pl.BlockSpec((H, D_out), lambda i: (0, 0)),   # w2^T: resident
            pl.BlockSpec((D_out, 1), lambda i: (0, 0)),   # b2: resident
        ],
        out_specs=pl.BlockSpec((D_out, TB), lambda i: (0, i)),
        compiler_params=pltpu.CompilerParams(
            dimension_semantics=("parallel",)),
        cost_estimate=pl.CostEstimate(
            flops=flops,
            transcendentals=B_pad * D_out,
            bytes_accessed=bytes_accessed),
    )(x_t, w1, b1_col, w2_t, b2_col)

    return out_t[:, :B].T                                      # [B, D_out]


if __name__ == "__main__":
    # MLP_Classifier(input_size=32, hidden_size=32, output_size=1)
    batch, input_size, hidden_size, output_size = 8, 32, 32, 1

    key = jax.random.PRNGKey(0)
    kx, ka, kw1, kb1, kw2, kb2, kx2 = jax.random.split(key, 7)

    x = jax.random.normal(kx, (batch, input_size), dtype=jnp.float32)
    x_agents = jax.random.normal(ka, (batch, 4), dtype=jnp.float32)  # unused by forward

    # PyTorch nn.Linear init: U(-1/sqrt(fan_in), 1/sqrt(fan_in)); weight is [out, in].
    bound1 = 1.0 / jnp.sqrt(jnp.float32(input_size))
    w1 = jax.random.uniform(kw1, (hidden_size, input_size), jnp.float32, -bound1, bound1)
    b1 = jax.random.uniform(kb1, (hidden_size,), jnp.float32, -bound1, bound1)
    bound2 = 1.0 / jnp.sqrt(jnp.float32(hidden_size))
    w2 = jax.random.uniform(kw2, (output_size, hidden_size), jnp.float32, -bound2, bound2)
    b2 = jax.random.uniform(kb2, (output_size,), jnp.float32, -bound2, bound2)

    def ref_fn(xx):
        return jax.nn.sigmoid(jnp.maximum(xx @ w1.T + b1, 0.0) @ w2.T + b2)

    # Small demo run (matches the module at its natural tiny shapes).
    out = jax.block_until_ready(mlp_classifier_forward(x, x_agents, w1, b1, w2, b2))
    assert out.shape == (batch, output_size)
    assert jnp.allclose(out, ref_fn(x), atol=1e-5, rtol=1e-5)

    # Also exercise the batch-tiled (multi-grid-step, padded) path.
    x_big = jax.random.normal(kx2, (640, input_size), dtype=jnp.float32)
    out_big = jax.block_until_ready(
        mlp_classifier_forward(x_big, None, w1, b1, w2, b2))
    assert out_big.shape == (640, output_size)
    assert jnp.allclose(out_big, ref_fn(x_big), atol=1e-5, rtol=1e-5)

    print("KERNEL_OK")
</pallas_src>

<mosaic_0001>
module attributes {stable_mosaic.version = 11 : i64} {
  func.func @mlp_kernel(%arg0: i32, %arg1: memref<32x128xf32, #tpu.memory_space<vmem>>, %arg2: memref<32x32xf32, #tpu.memory_space<vmem>>, %arg3: memref<32x1xf32, #tpu.memory_space<vmem>>, %arg4: memref<32x1xf32, #tpu.memory_space<vmem>>, %arg5: memref<1x1xf32, #tpu.memory_space<vmem>>, %arg6: memref<1x128xf32, #tpu.memory_space<vmem>>) attributes {dimension_semantics = [#tpu.dimension_semantics<parallel>], iteration_bounds = array<i64: 1>, scalar_prefetch = 0 : i64, scratch_operands = 0 : i64, tpu.core_type = #tpu.core_type<tc>, window_params = [{transform_indices = @transform_0, window_bounds = array<i64: 32, 128>}, {pipeline_mode = #tpu.pipeline_mode<synchronous>, transform_indices = @transform_1, window_bounds = array<i64: 32, 32>}, {pipeline_mode = #tpu.pipeline_mode<synchronous>, transform_indices = @transform_2, window_bounds = array<i64: 32, 1>}, {pipeline_mode = #tpu.pipeline_mode<synchronous>, transform_indices = @transform_3, window_bounds = array<i64: 32, 1>}, {pipeline_mode = #tpu.pipeline_mode<synchronous>, transform_indices = @transform_4, window_bounds = array<i64: 1, 1>}, {transform_indices = @transform_5, window_bounds = array<i64: 1, 128>}]} {
    %c0 = arith.constant 0 : index
    %c0_0 = arith.constant 0 : index
    %0 = vector.load %arg2[%c0, %c0_0] : memref<32x32xf32, #tpu.memory_space<vmem>>, vector<32x32xf32>
    %c0_1 = arith.constant 0 : index
    %c0_2 = arith.constant 0 : index
    %1 = vector.load %arg1[%c0_1, %c0_2] : memref<32x128xf32, #tpu.memory_space<vmem>>, vector<32x128xf32>
    %cst = arith.constant dense<0.000000e+00> : vector<32x128xf32>
    %2 = tpu.matmul %0, %1, %cst {dimension_numbers = #tpu.dot_dimension_numbers<[1], [0], [0], [1], [0, 0, 1, 1], [], []>} : vector<32x32xf32>, vector<32x128xf32>, vector<32x128xf32> -> vector<32x128xf32>
    %c0_3 = arith.constant 0 : index
    %c0_4 = arith.constant 0 : index
    %3 = vector.load %arg3[%c0_3, %c0_4] : memref<32x1xf32, #tpu.memory_space<vmem>>, vector<32x1xf32>
    %4 = vector.broadcast %3 : vector<32x1xf32> to vector<32x128xf32>
    %5 = arith.addf %2, %4 : vector<32x128xf32>
    %cst_5 = arith.constant 0.000000e+00 : f32
    %6 = vector.broadcast %cst_5 : f32 to vector<32x128xf32>
    %7 = arith.maximumf %5, %6 : vector<32x128xf32>
    %c0_6 = arith.constant 0 : index
    %c0_7 = arith.constant 0 : index
    %8 = vector.load %arg4[%c0_6, %c0_7] : memref<32x1xf32, #tpu.memory_space<vmem>>, vector<32x1xf32>
    %9 = vector.broadcast %8 : vector<32x1xf32> to vector<32x128xf32>
    %10 = arith.mulf %7, %9 : vector<32x128xf32>
    %cst_8 = arith.constant dense<0.000000e+00> : vector<128xf32>
    %11 = vector.multi_reduction <add>, %10, %cst_8 [0] : vector<32x128xf32> to vector<128xf32>
    %12 = vector.shape_cast %11 : vector<128xf32> to vector<1x128xf32>
    %c0_9 = arith.constant 0 : index
    %c0_10 = arith.constant 0 : index
    %13 = vector.load %arg5[%c0_9, %c0_10] : memref<1x1xf32, #tpu.memory_space<vmem>>, vector<1x1xf32>
    %14 = vector.broadcast %13 : vector<1x1xf32> to vector<1x128xf32>
    %15 = arith.addf %12, %14 : vector<1x128xf32>
    %cst_11 = arith.constant 5.000000e-01 : f32
    %16 = vector.broadcast %cst_11 : f32 to vector<1x128xf32>
    %17 = arith.mulf %16, %15 : vector<1x128xf32>
    %18 = math.tanh %17 : vector<1x128xf32>
    %cst_12 = arith.constant 1.000000e+00 : f32
    %19 = vector.broadcast %cst_12 : f32 to vector<1x128xf32>
    %20 = arith.addf %18, %19 : vector<1x128xf32>
    %cst_13 = arith.constant 5.000000e-01 : f32
    %21 = vector.broadcast %cst_13 : f32 to vector<1x128xf32>
    %22 = arith.mulf %21, %20 : vector<1x128xf32>
    %c0_14 = arith.constant 0 : index
    %c0_15 = arith.constant 0 : index
    %23 = vector.load %arg6[%c0_14, %c0_15] : memref<1x128xf32, #tpu.memory_space<vmem>>, vector<1x128xf32>
    tpu.vector_store %arg6[%c0_14, %c0_15], %22 {strides = array<i32>} : memref<1x128xf32, #tpu.memory_space<vmem>>, vector<1x128xf32>,
    return
  }
  func.func @transform_0(%arg0: i32) -> (i32, i32) {
    %c0_i32 = arith.constant 0 : i32
    %c0_i32_0 = arith.constant 0 : i32
    return %c0_i32, %arg0 : i32, i32
  }
  func.func @transform_1(%arg0: i32) -> (i32, i32) {
    %c0_i32 = arith.constant 0 : i32
    %c0_i32_0 = arith.constant 0 : i32
    %c0_i32_1 = arith.constant 0 : i32
    return %c0_i32, %c0_i32_0 : i32, i32
  }
  func.func @transform_2(%arg0: i32) -> (i32, i32) {
    %c0_i32 = arith.constant 0 : i32
    %c0_i32_0 = arith.constant 0 : i32
    %c0_i32_1 = arith.constant 0 : i32
    return %c0_i32, %c0_i32_0 : i32, i32
  }
  func.func @transform_3(%arg0: i32) -> (i32, i32) {
    %c0_i32 = arith.constant 0 : i32
    %c0_i32_0 = arith.constant 0 : i32
    %c0_i32_1 = arith.constant 0 : i32
    return %c0_i32, %c0_i32_0 : i32, i32
  }
  func.func @transform_4(%arg0: i32) -> (i32, i32) {
    %c0_i32 = arith.constant 0 : i32
    %c0_i32_0 = arith.constant 0 : i32
    %c0_i32_1 = arith.constant 0 : i32
    return %c0_i32, %c0_i32_0 : i32, i32
  }
  func.func @transform_5(%arg0: i32) -> (i32, i32) {
    %c0_i32 = arith.constant 0 : i32
    %c0_i32_0 = arith.constant 0 : i32
    return %c0_i32, %arg0 : i32, i32
  }
}

</mosaic_0001>

<llo_original>
// kernel: tpu_custom_call.1
$region0: #{tpu_custom_call.1}
  #allocation0 [shape = 'u32[]', space=smem, size = 0x4, offset = 0x4, fixed_abs, tag = 'smem constant byte address 0x4 - core index']
  #allocation1 [shape = 'u32[144,128]{1,0:T(1,128)}', space=vmem, size = 0x12000, scoped, tag = 'internal scratch']
  #allocation2 [shape = 'f32[1,1]{1,0:T(1,128)S(1)}', space=vmem, size = 0x200, scoped, tag = 'scoped memory for tpu_custom_call.1']
  %s0 = inlined_call_operand.vmem [shape: f32[32,128], index: 0, kind: input, shape index: {}]
  %s1 = inlined_call_operand.vmem [shape: f32[32,32], index: 1, kind: input, shape index: {}]
  %s2 = inlined_call_operand.vmem [shape: f32[32,1], index: 2, kind: input, shape index: {}]
  %s3 = inlined_call_operand.vmem [shape: f32[32,1], index: 3, kind: input, shape index: {}]
  %s4 = inlined_call_operand.<no memory space> [shape: f32[1,1], index: 4, kind: input, shape index: {}]
  %s5 = inlined_call_operand.hbm [shape: f32[1,128], index: 5, kind: output, shape index: {}]
  %s6 = sld [smem:[#allocation0]]
  $region30: #{tpu_custom_call.1} parent=0
    _
  %s8 = ssub.s32 1, %s6
  %s9 = scalar_select 0, %s8, %s6
  %v10 = vstv %s4
  %11 = vst [vmem:[#allocation2] sm:$0x1] %v10
  $region1: #{tpu_custom_call.1} parent=0
    #allocation3 [shape = 'u8[512]{0}', space=vmem, size = 0x400, scoped, tag = 'output window, operand 0, single buffered']
    #allocation4 [shape = 's32[1]{0}', space=sflag, size = 0x4, scoped, tag = 'scoped memory for tpu_custom_call.1']
    %12 = vsyncpa [#allocation4], 0
    // Predicated region
    $region2: #{tpu_custom_call.1} parent=1 // pred_check
      _
    $region3: #{tpu_custom_call.1} parent=1 // pred_check_branch
      %14 = sbr.rel (0) target = $region5
    $region4: #{tpu_custom_call.1} parent=1 // pred_region
      _
    $region5: #{tpu_custom_call.1} parent=1 // pred_fallthru
      _
    // Predicated region
    $region6: #{tpu_custom_call.1} parent=1 // pred_check
      _
    $region7: #{tpu_custom_call.1} parent=1 // pred_check_branch
      %16 = sbr.rel (0) target = $region9
    $region8: #{tpu_custom_call.1} parent=1 // pred_region
      _
    $region9: #{tpu_custom_call.1} parent=1 // pred_fallthru
      _
    // Predicated region
    $region10: #{tpu_custom_call.1} parent=1 // pred_check
      _
    $region11: #{tpu_custom_call.1} parent=1 // pred_check_branch
      %18 = sbr.rel (0) target = $region13
    $region12: #{tpu_custom_call.1} parent=1 // pred_region
      _
    $region13: #{tpu_custom_call.1} parent=1 // pred_fallthru
      _
    // Predicated region
    $region14: #{tpu_custom_call.1} parent=1 // pred_check
      _
    $region15: #{tpu_custom_call.1} parent=1 // pred_check_branch
      %20 = sbr.rel (0) target = $region17
    $region16: #{tpu_custom_call.1} parent=1 // pred_region
      _
    $region17: #{tpu_custom_call.1} parent=1 // pred_fallthru
      _
    // Predicated region
    $region18: #{tpu_custom_call.1} parent=1 // pred_check
      _
    $region19: #{tpu_custom_call.1} parent=1 // pred_check_branch
      %22 = sbr.rel (0) target = $region21
    $region20: #{tpu_custom_call.1} parent=1 // pred_region
      _
    $region21: #{tpu_custom_call.1} parent=1 // pred_fallthru
      _
    %v23 = vld [vmem:[%s1] sm:$0xff]
    %v24 = vld [vmem:[%s1 + $0x8] sm:$0xff]
    %v25 = vld [vmem:[%s1 + $0x10] sm:$0xff]
    %v26 = vld [vmem:[%s1 + $0x18] sm:$0xff]
    %v27 = vld [vmem:[%s0] sm:$0xff]
    %v28 = vld [vmem:[%s0 + $0x8] sm:$0xff]
    %v29 = vld [vmem:[%s0 + $0x10] sm:$0xff]
    %v30 = vld [vmem:[%s0 + $0x18] sm:$0xff]
    %v31 = vld [vmem:[%s2] sm:$0xff]
    %v32 = vld [vmem:[%s2 + $0x8] sm:$0xff]
    %v33 = vld [vmem:[%s2 + $0x10] sm:$0xff]
    %v34 = vld [vmem:[%s2 + $0x18] sm:$0xff]
    %36 = vset.pattern.permute.xlu0 0
    %37 = vperm.xlu0 %36, %v31
    %v38 = vpop.permute.xlu0 %37
    %41 = vset.pattern.permute.xlu0 0
    %42 = vperm.xlu0 %41, %v32
    %v43 = vpop.permute.xlu0 %42
    %46 = vset.pattern.permute.xlu0 0
    %47 = vperm.xlu0 %46, %v33
    %v48 = vpop.permute.xlu0 %47
    %51 = vset.pattern.permute.xlu0 0
    %52 = vperm.xlu0 %51, %v34
    %v53 = vpop.permute.xlu0 %52
    %vm55 = vcmask 261120
    %v57 = vsel %vm55, %v23, 0
    %v60 = vsel %vm55, %v24, 0
    %v63 = vsel %vm55, %v25, 0
    %v66 = vsel %vm55, %v26, 0
    %68 = vmatprep.subr.mxu0 0.0
    %69 = vmatpush1.msra.mxu0 %v27
    %70 = vmatprep.subr.mxu0 0.0
    %71 = vmatpush1.msra.mxu0 %v28
    %72 = vmatprep.subr.mxu0 0.0
    %73 = vmatpush1.msra.mxu0 %v29
    %74 = vmatprep.subr.mxu0 0.0
    %75 = vmatpush1.msra.mxu0 %v30
    %76 = vmatprep.subr.mxu0 0.0
    %77 = vmatpush1.msra.mxu0 0.0
    %78 = vmatprep.subr.mxu0 0.0
    %79 = vmatpush1.msra.mxu0 0.0
    %80 = vmatprep.subr.mxu0 0.0
    %81 = vmatpush1.msra.mxu0 0.0
    %82 = vmatprep.subr.mxu0 0.0
    %83 = vmatpush1.msra.mxu0 0.0
    %84 = vmatprep.subr.mxu0 0.0
    %85 = vmatpush1.msra.mxu0 0.0
    %86 = vmatprep.subr.mxu0 0.0
    %87 = vmatpush1.msra.mxu0 0.0
    %88 = vmatprep.subr.mxu0 0.0
    %89 = vmatpush1.msra.mxu0 0.0
    %90 = vmatprep.subr.mxu0 0.0
    %91 = vmatpush1.msra.mxu0 0.0
    %92 = vmatprep.subr.mxu0 0.0
    %93 = vmatpush1.msra.mxu0 0.0
    %94 = vmatprep.subr.mxu0 0.0
    %95 = vmatpush1.msra.mxu0 0.0
    %96 = vmatprep.subr.mxu0 0.0
    %97 = vmatpush1.msra.mxu0 0.0
    %98 = vmatprep.subr.mxu0 0.0
    %99 = vmatpush1.msra.mxu0 0.0
    %100 = vmatprep.subr.mxu0 0.0
    %101 = vmatpush1.msra.mxu0 0.0
    %102 = vmatprep.subr.mxu0 0.0
    %103 = vmatpush1.msra.mxu0 0.0
    %104 = vmatprep.subr.mxu0 0.0
    %105 = vmatpush1.msra.mxu0 0.0
    %106 = vmatprep.subr.mxu0 0.0
    %107 = vmatpush1.msra.mxu0 0.0
    %108 = vmatprep.subr.mxu0 0.0
    %109 = vmatpush1.msra.mxu0 0.0
    %110 = vmatprep.subr.mxu0 0.0
    %111 = vmatpush1.msra.mxu0 0.0
    %112 = vmatprep.subr.mxu0 0.0
    %113 = vmatpush1.msra.mxu0 0.0
    %114 = vmatprep.subr.mxu0 0.0
    %115 = vmatpush1.msra.mxu0 0.0
    %116 = vmatprep.subr.mxu0 0.0
    %117 = vmatpush1.msra.mxu0 0.0
    %118 = vmatprep.subr.mxu0 0.0
    %119 = vmatpush1.msra.mxu0 0.0
    %120 = vmatprep.subr.mxu0 0.0
    %121 = vmatpush1.msra.mxu0 0.0
    %122 = vmatprep.subr.mxu0 0.0
    %123 = vmatpush1.msra.mxu0 0.0
    %124 = vmatprep.subr.mxu0 0.0
    %125 = vmatpush1.msra.mxu0 0.0
    %126 = vmatprep.subr.mxu0 0.0
    %127 = vmatpush1.msra.mxu0 0.0
    %128 = vmatprep.subr.mxu0 0.0
    %129 = vmatpush1.msra.mxu0 0.0
    %130 = vmatprep.subr.mxu0 0.0
    %131 = vmatpush1.msra.mxu0 0.0
    %132 = vmatprep.mubr.f32.mxu0 0.0
    %133 = vmatmul.mubr.f32.gmra.mrb[0].mxu0 %v57
    %v134 = vpop.f32.mrb[0].mxu0
    %v135 = vadd.f32 %v38, %v134
    %v136 = vpop.f32.mrb[0].mxu0
    %137 = vmatprep.mubr.f32.mxu0 0.0
    %138 = vmatmul.mubr.f32.gmra.mrb[0].mxu0 %v60
    %v139 = vpop.f32.mrb[0].mxu0
    %v140 = vadd.f32 %v43, %v139
    %v141 = vpop.f32.mrb[0].mxu0
    %142 = vmatprep.mubr.f32.mxu0 0.0
    %143 = vmatmul.mubr.f32.gmra.mrb[0].mxu0 %v63
    %v144 = vpop.f32.mrb[0].mxu0
    %v145 = vadd.f32 %v48, %v144
    %v146 = vpop.f32.mrb[0].mxu0
    %147 = vmatprep.mubr.f32.mxu0 0.0
    %148 = vmatmul.mubr.f32.gmra.mrb[0].mxu0 %v66
    %v149 = vpop.f32.mrb[0].mxu0
    %v150 = vadd.f32 %v53, %v149
    %v151 = vpop.f32.mrb[0].mxu0
    %152 = vdwg.mxu0
    %v153 = vmax.f32 %v135, 0.0
    %v154 = vmax.f32 %v140, 0.0
    %v155 = vmax.f32 %v145, 0.0
    %v156 = vmax.f32 %v150, 0.0
    %v157 = vld [vmem:[%s3] sm:$0xff]
    %v158 = vld [vmem:[%s3 + $0x8] sm:$0xff]
    %v159 = vld [vmem:[%s3 + $0x10] sm:$0xff]
    %v160 = vld [vmem:[%s3 + $0x18] sm:$0xff]
    %162 = vset.pattern.permute.xlu0 0
    %163 = vperm.xlu0 %162, %v157
    %v164 = vpop.permute.xlu0 %163
    %167 = vset.pattern.permute.xlu0 0
    %168 = vperm.xlu0 %167, %v158
    %v169 = vpop.permute.xlu0 %168
    %172 = vset.pattern.permute.xlu0 0
    %173 = vperm.xlu0 %172, %v159
    %v174 = vpop.permute.xlu0 %173
    %177 = vset.pattern.permute.xlu0 0
    %178 = vperm.xlu0 %177, %v160
    %v179 = vpop.permute.xlu0 %178
    %v181 = vmul.f32 %v153, %v164
    %v182 = vmul.f32 %v154, %v169
    %v183 = vmul.f32 %v155, %v174
    %v184 = vmul.f32 %v156, %v179
    %v185 = vadd.f32 %v181, %v182
    %v186 = vadd.f32 %v185, %v183
    %v187 = vadd.f32 %v186, %v184
    %v188 = vrot.slane %v187, 4
    %v189 = vadd.f32 %v187, %v188
    %v190 = vrot.slane %v189, 2
    %v191 = vadd.f32 %v189, %v190
    %v192 = vrot.slane %v191, 1
    %v193 = vadd.f32 %v191, %v192
    %v194 = vld [vmem:[#allocation2] sm:$0x1]
    %196 = vset.pattern.permute.xlu0 0
    %197 = vperm.xlu0 %196, %v194
    %v198 = vpop.permute.xlu0 %197
    %v200 = vlaneseq
    %v201 = vshrl.u32 %v200, 7
    %v202 = vsub.s32 0, %v201
    %v203 = vrot.slane %v198, %v202
    %v204 = vadd.f32 %v193, %v203
    %v205 = vmul.f32 %v204, 0.5
    %v206 = vtanh.pop %v205
    %v207 = vadd.f32 %v206, 1.0
    %v208 = vmul.f32 %v207, 0.5
    %209 = vst [vmem:[#allocation3] sm:$0x1] %v208
    // Predicated region
    $region22: #{tpu_custom_call.1} parent=1 // pred_check
      _
    $region23: #{tpu_custom_call.1} parent=1 // pred_check_branch
      %211 = sbr.rel (0) target = $region25
    $region24: #{tpu_custom_call.1} parent=1 // pred_region
      %s213 = ssub.s32 16, 16
      %214 = vsyncadd [#allocation4], %s213
      %s216 = sshll.u32 [#allocation3], 4
      %s217 = int_to_ptr.vmem [resolvable:$true] %s216
      %219 = dma.vmem_to_hbm [thread:$0]  %s217, 16, %s5, [#allocation4]
    $region25: #{tpu_custom_call.1} parent=1 // pred_fallthru
      _
    // Predicated region
    $region26: #{tpu_custom_call.1} parent=1 // pred_check
      _
    $region27: #{tpu_custom_call.1} parent=1 // pred_check_branch
      %221 = sbr.rel (0) target = $region29
    $region28: #{tpu_custom_call.1} parent=1 // pred_region
      %222 = dma.done [#allocation4], 16
    $region29: #{tpu_custom_call.1} parent=1 // pred_fallthru
      _
    %223 = vsyncpa [#allocation4], 1

</llo_original>
